<compile_context>
chip_gen: v6e
topology: v6e:2x2x1
jax: 0.10.0
libtpu: 0.0.40
codegen_flags: <defaults>
</compile_context>

<pallas_src>
import functools

import jax
import jax.numpy as jnp
from jax.experimental import pallas as pl
from jax.experimental.pallas import tpu as pltpu


def _round_up(n, m):
    return (n + m - 1) // m * m


def _cdiv(a, b):
    return (a + b - 1) // b


def _activation(h, kind):
    if kind == "relu":
        return jnp.maximum(h, 0.0)
    if kind == "tanh":
        return jnp.tanh(h)
    if kind == "leakyrelu":
        return jnp.where(h >= 0.0, h, 0.01 * h)
    raise ValueError(kind)


def _ann_kernel(activation,
                x_ref,
                w1_ref, b1_ref,
                w2_ref, b2_ref,
                w3_ref, b3_ref,
                w4_ref, b4_ref,
                w5_ref, b5_ref,
                o_ref):
    # x arrives f32; cast to bf16 here (VPU work hidden under the matmuls)
    # instead of paying a separate full-HBM cast pass in the wrapper.
    h = x_ref[...].astype(jnp.bfloat16)                              # (T, in)

    # fc1..fc3: bf16 MXU matmuls, f32 accumulation + bias + activation.
    # Eval-mode BatchNorm is already folded into the following layer's (W, b).
    for w_ref, b_ref in ((w1_ref, b1_ref), (w2_ref, b2_ref), (w3_ref, b3_ref)):
        z = jnp.dot(h, w_ref[...], preferred_element_type=jnp.float32) + b_ref[...]
        h = _activation(z, activation).astype(jnp.bfloat16)          # bf16 for next MXU op

    # dropout1: identity in eval mode.

    # fc4: keep the activated result in f32 for the final contraction.
    z = jnp.dot(h, w4_ref[...], preferred_element_type=jnp.float32) + b4_ref[...]
    h4 = _activation(z, activation)                                  # (T, 2u) f32

    # fc5 + sigmoid, emitted lane-dense: contract the feature axis of BOTH
    # operands (A @ B^T form, the same contraction production flash kernels use)
    # so the logits land as a row with batch on the lane axis — no (T, 1) column
    # and no masked lane-width-1 stores.  w5 was replicated to 8 rows in
    # prepare_params so the MXU sees a full sublane group; row 0 is the answer.
    logits = jax.lax.dot_general(
        w5_ref[...], h4, (((1,), (1,)), ((), ())),
        preferred_element_type=jnp.float32)                          # (8, T)
    logits = logits[0:1, :] + b5_ref[...]                            # (1, T)
    o_ref[...] = pl.reciprocal(1.0 + jnp.exp(-logits), approx=True)  # EUP sigmoid


def init_params(key, input_size, units):
    """Deterministic parameter init mirroring the shapes of SimpleANN.__init__."""
    dims = [(input_size, units),
            (units, 2 * units),
            (2 * units, 4 * units),
            (4 * units, 2 * units),
            (2 * units, 1)]
    params = {}
    for i, (fan_in, fan_out) in enumerate(dims, start=1):
        key, kw, kb = jax.random.split(key, 3)
        bound = 1.0 / jnp.sqrt(float(fan_in))
        # Stored as (in, out) == transpose of PyTorch's (out, in) Linear weight.
        params[f"w{i}"] = jax.random.uniform(kw, (fan_in, fan_out), jnp.float32,
                                             -bound, bound)
        params[f"b{i}"] = jax.random.uniform(kb, (1, fan_out), jnp.float32,
                                             -bound, bound)
    # BatchNorm1d parameters / running stats for bn1..bn4.
    bn_dims = [units, 2 * units, 4 * units, 2 * units]
    for i, d in enumerate(bn_dims, start=1):
        key, km, kv, kg, kbt = jax.random.split(key, 5)
        params[f"bn{i}_gamma"] = 1.0 + 0.1 * jax.random.normal(kg, (1, d), jnp.float32)
        params[f"bn{i}_beta"] = 0.1 * jax.random.normal(kbt, (1, d), jnp.float32)
        params[f"bn{i}_mean"] = 0.1 * jax.random.normal(km, (1, d), jnp.float32)
        params[f"bn{i}_var"] = jax.random.uniform(kv, (1, d), jnp.float32, 0.5, 1.5)
    return params


def prepare_params(params, eps=1e-5):
    """Fold eval-mode BatchNorm into the next Linear and cast weights to bf16.

    Run ONCE per parameter set (hoisted out of the per-forward path):
      (h*s + t) @ W + b  ==  h @ (s ∘ W) + (t @ W + b),  s = gamma/sqrt(var+eps),
      t = beta - mean*s.
    """
    w = {i: params[f"w{i}"].astype(jnp.float32) for i in range(1, 6)}
    b = {i: params[f"b{i}"].astype(jnp.float32) for i in range(1, 6)}
    for i in range(1, 5):
        s = params[f"bn{i}_gamma"] * jax.lax.rsqrt(params[f"bn{i}_var"] + eps)
        t = params[f"bn{i}_beta"] - params[f"bn{i}_mean"] * s
        b[i + 1] = t @ w[i + 1] + b[i + 1]          # uses the original W_{i+1}
        w[i + 1] = s.reshape(-1, 1) * w[i + 1]

    folded = {}
    for i in range(1, 5):
        folded[f"w{i}"] = w[i].astype(jnp.bfloat16)   # MXU inputs
        folded[f"b{i}"] = b[i]                        # (1, out) f32
    # fc5 column as a (8, 2*units) replicated row block (see kernel); f32 for
    # final-layer accuracy.
    folded["w5"] = jnp.tile(w[5].T, (8, 1))
    folded["b5"] = b[5].reshape(1, 1)
    return folded


def _pick_tile(batch, requested):
    """Batch tile: multiple of 128 (lane-dense output store), >= 2 grid steps
    when the batch allows it (v7x megacore), capped by `requested`."""
    if batch <= 128:
        return batch                     # one full-array block (always layout-legal)
    tile = _round_up(max(128, int(requested)), 128)
    tile = min(tile, _round_up(_cdiv(batch, 2), 128))   # keep >= 2 steps
    return max(tile, 128)


def _vmem_limit_bytes(tile_b, input_size, units):
    # Rough per-step working set: f32 + bf16 activations for every layer,
    # double-buffered f32 x block, resident weights, 2x slack for Mosaic
    # temporaries.  Clamped to [32 MiB, 48 MiB]: 48 MiB still leaves headroom
    # on v7x's 64 MiB physical VMEM and is far below v5e/v6e's 128 MiB.
    feat = input_size + 9 * units + 1
    act_bytes = 6 * tile_b * feat
    x_bytes = 2 * 4 * tile_b * input_size
    w_bytes = 4 * units * (input_size + 2 * units + 8 * units + 8 * units + 2)
    est = 2 * (act_bytes + x_bytes + w_bytes)
    return int(max(32 << 20, min(48 << 20, est)))


def simple_ann_forward(x, folded, activation="relu", tile_b=4096):
    """SimpleANN forward (eval mode) as one batch-tiled Pallas kernel.

    `folded` comes from prepare_params(params) (called once per parameter set).
    """
    batch, input_size = x.shape
    units = folded["w1"].shape[1]

    tile = _pick_tile(batch, tile_b)
    num_tiles = _cdiv(batch, tile)       # partial last block; no jnp.pad copy of x

    def resident(arr):
        # Constant index_map: fetched once, stays resident in VMEM across the grid.
        return pl.BlockSpec(arr.shape, lambda i: (0, 0))

    operands = [x]
    in_specs = [pl.BlockSpec((tile, input_size), lambda i: (i, 0))]
    for i in range(1, 5):
        operands += [folded[f"w{i}"], folded[f"b{i}"]]
        in_specs += [resident(folded[f"w{i}"]), resident(folded[f"b{i}"])]
    operands += [folded["w5"], folded["b5"]]
    in_specs += [resident(folded["w5"]), resident(folded["b5"])]

    out = pl.pallas_call(
        functools.partial(_ann_kernel, activation),
        out_shape=jax.ShapeDtypeStruct((1, num_tiles * tile), jnp.float32),
        grid=(num_tiles,),
        in_specs=in_specs,
        out_specs=pl.BlockSpec((1, tile), lambda i: (0, i)),   # lane-dense output row
        compiler_params=pltpu.CompilerParams(
            dimension_semantics=("parallel",),
            vmem_limit_bytes=_vmem_limit_bytes(tile, input_size, units),
        ),
    )(*operands)
    # Back to the module's (B, 1) layout; tiny slice/reshape in the wrapper.
    return out[0, :batch].reshape(batch, 1)


def simple_ann_reference(x, params, activation="relu", eps=1e-5):
    """Pure-JAX f32 reference mirroring the PyTorch forward (eval mode)."""
    h = x.astype(jnp.float32)
    for i in range(1, 5):
        h = h @ params[f"w{i}"] + params[f"b{i}"]
        h = _activation(h, activation)
        s = params[f"bn{i}_gamma"] * jax.lax.rsqrt(params[f"bn{i}_var"] + eps)
        t = params[f"bn{i}_beta"] - params[f"bn{i}_mean"] * s
        h = h * s + t
    h = h @ params["w5"] + params["b5"]
    return jax.nn.sigmoid(h)


if __name__ == "__main__":
    key = jax.random.PRNGKey(0)
    key_x, key_p = jax.random.split(key)

    # Small shapes; batch=200 exercises the multi-step grid + partial-last-block path.
    batch, input_size, units = 200, 32, 32
    x = jax.random.normal(key_x, (batch, input_size), jnp.float32)
    params = init_params(key_p, input_size, units)

    folded = prepare_params(params)                 # once per parameter set
    y = simple_ann_forward(x, folded, activation="relu")
    jax.block_until_ready(y)

    assert y.shape == (batch, 1), y.shape
    assert bool(jnp.all((y >= -1e-3) & (y <= 1.0 + 1e-3)))

    y_ref = simple_ann_reference(x, params, activation="relu")
    max_err = float(jnp.max(jnp.abs(y - y_ref)))
    assert max_err < 5e-2, f"max abs err vs reference: {max_err}"

    print("KERNEL_OK")
</pallas_src>

<mosaic_0001>
module attributes {stable_mosaic.version = 11 : i64} {
  func.func @_ann_kernel(%arg0: i32, %arg1: memref<128x32xf32, #tpu.memory_space<vmem>>, %arg2: memref<32x32xbf16, #tpu.memory_space<vmem>>, %arg3: memref<1x32xf32, #tpu.memory_space<vmem>>, %arg4: memref<32x64xbf16, #tpu.memory_space<vmem>>, %arg5: memref<1x64xf32, #tpu.memory_space<vmem>>, %arg6: memref<64x128xbf16, #tpu.memory_space<vmem>>, %arg7: memref<1x128xf32, #tpu.memory_space<vmem>>, %arg8: memref<128x64xbf16, #tpu.memory_space<vmem>>, %arg9: memref<1x64xf32, #tpu.memory_space<vmem>>, %arg10: memref<8x64xf32, #tpu.memory_space<vmem>>, %arg11: memref<1x1xf32, #tpu.memory_space<vmem>>, %arg12: memref<1x128xf32, #tpu.memory_space<vmem>>) attributes {dimension_semantics = [#tpu.dimension_semantics<parallel>], iteration_bounds = array<i64: 2>, scalar_prefetch = 0 : i64, scratch_operands = 0 : i64, tpu.core_type = #tpu.core_type<tc>, window_params = [{transform_indices = @transform_0, window_bounds = array<i64: 128, 32>}, {pipeline_mode = #tpu.pipeline_mode<synchronous>, transform_indices = @transform_1, window_bounds = array<i64: 32, 32>}, {pipeline_mode = #tpu.pipeline_mode<synchronous>, transform_indices = @transform_2, window_bounds = array<i64: 1, 32>}, {pipeline_mode = #tpu.pipeline_mode<synchronous>, transform_indices = @transform_3, window_bounds = array<i64: 32, 64>}, {pipeline_mode = #tpu.pipeline_mode<synchronous>, transform_indices = @transform_4, window_bounds = array<i64: 1, 64>}, {pipeline_mode = #tpu.pipeline_mode<synchronous>, transform_indices = @transform_5, window_bounds = array<i64: 64, 128>}, {pipeline_mode = #tpu.pipeline_mode<synchronous>, transform_indices = @transform_6, window_bounds = array<i64: 1, 128>}, {pipeline_mode = #tpu.pipeline_mode<synchronous>, transform_indices = @transform_7, window_bounds = array<i64: 128, 64>}, {pipeline_mode = #tpu.pipeline_mode<synchronous>, transform_indices = @transform_8, window_bounds = array<i64: 1, 64>}, {pipeline_mode = #tpu.pipeline_mode<synchronous>, transform_indices = @transform_9, window_bounds = array<i64: 8, 64>}, {pipeline_mode = #tpu.pipeline_mode<synchronous>, transform_indices = @transform_10, window_bounds = array<i64: 1, 1>}, {transform_indices = @transform_11, window_bounds = array<i64: 1, 128>}]} {
    %c0 = arith.constant 0 : index
    %c0_0 = arith.constant 0 : index
    %0 = vector.load %arg1[%c0, %c0_0] : memref<128x32xf32, #tpu.memory_space<vmem>>, vector<128x32xf32>
    %1 = arith.truncf %0 : vector<128x32xf32> to vector<128x32xbf16>
    %c0_1 = arith.constant 0 : index
    %c0_2 = arith.constant 0 : index
    %2 = vector.load %arg2[%c0_1, %c0_2] : memref<32x32xbf16, #tpu.memory_space<vmem>>, vector<32x32xbf16>
    %cst = arith.constant dense<0.000000e+00> : vector<128x32xf32>
    %3 = tpu.matmul %1, %2, %cst {dimension_numbers = #tpu.dot_dimension_numbers<[1], [0], [0], [1], [0, 0, 1, 1], [], []>} : vector<128x32xbf16>, vector<32x32xbf16>, vector<128x32xf32> -> vector<128x32xf32>
    %c0_3 = arith.constant 0 : index
    %c0_4 = arith.constant 0 : index
    %4 = vector.load %arg3[%c0_3, %c0_4] : memref<1x32xf32, #tpu.memory_space<vmem>>, vector<1x32xf32>
    %5 = vector.broadcast %4 : vector<1x32xf32> to vector<128x32xf32>
    %6 = arith.addf %3, %5 : vector<128x32xf32>
    %cst_5 = arith.constant 0.000000e+00 : f32
    %7 = vector.broadcast %cst_5 : f32 to vector<128x32xf32>
    %8 = arith.maximumf %6, %7 : vector<128x32xf32>
    %9 = arith.truncf %8 : vector<128x32xf32> to vector<128x32xbf16>
    %c0_6 = arith.constant 0 : index
    %c0_7 = arith.constant 0 : index
    %10 = vector.load %arg4[%c0_6, %c0_7] : memref<32x64xbf16, #tpu.memory_space<vmem>>, vector<32x64xbf16>
    %cst_8 = arith.constant dense<0.000000e+00> : vector<128x64xf32>
    %11 = tpu.matmul %9, %10, %cst_8 {dimension_numbers = #tpu.dot_dimension_numbers<[1], [0], [0], [1], [0, 0, 1, 1], [], []>} : vector<128x32xbf16>, vector<32x64xbf16>, vector<128x64xf32> -> vector<128x64xf32>
    %c0_9 = arith.constant 0 : index
    %c0_10 = arith.constant 0 : index
    %12 = vector.load %arg5[%c0_9, %c0_10] : memref<1x64xf32, #tpu.memory_space<vmem>>, vector<1x64xf32>
    %13 = vector.broadcast %12 : vector<1x64xf32> to vector<128x64xf32>
    %14 = arith.addf %11, %13 : vector<128x64xf32>
    %cst_11 = arith.constant 0.000000e+00 : f32
    %15 = vector.broadcast %cst_11 : f32 to vector<128x64xf32>
    %16 = arith.maximumf %14, %15 : vector<128x64xf32>
    %17 = arith.truncf %16 : vector<128x64xf32> to vector<128x64xbf16>
    %c0_12 = arith.constant 0 : index
    %c0_13 = arith.constant 0 : index
    %18 = vector.load %arg6[%c0_12, %c0_13] : memref<64x128xbf16, #tpu.memory_space<vmem>>, vector<64x128xbf16>
    %cst_14 = arith.constant dense<0.000000e+00> : vector<128x128xf32>
    %19 = tpu.matmul %17, %18, %cst_14 {dimension_numbers = #tpu.dot_dimension_numbers<[1], [0], [0], [1], [0, 0, 1, 1], [], []>} : vector<128x64xbf16>, vector<64x128xbf16>, vector<128x128xf32> -> vector<128x128xf32>
    %c0_15 = arith.constant 0 : index
    %c0_16 = arith.constant 0 : index
    %20 = vector.load %arg7[%c0_15, %c0_16] : memref<1x128xf32, #tpu.memory_space<vmem>>, vector<1x128xf32>
    %21 = vector.broadcast %20 : vector<1x128xf32> to vector<128x128xf32>
    %22 = arith.addf %19, %21 : vector<128x128xf32>
    %cst_17 = arith.constant 0.000000e+00 : f32
    %23 = vector.broadcast %cst_17 : f32 to vector<128x128xf32>
    %24 = arith.maximumf %22, %23 : vector<128x128xf32>
    %25 = arith.truncf %24 : vector<128x128xf32> to vector<128x128xbf16>
    %c0_18 = arith.constant 0 : index
    %c0_19 = arith.constant 0 : index
    %26 = vector.load %arg8[%c0_18, %c0_19] : memref<128x64xbf16, #tpu.memory_space<vmem>>, vector<128x64xbf16>
    %cst_20 = arith.constant dense<0.000000e+00> : vector<128x64xf32>
    %27 = tpu.matmul %25, %26, %cst_20 {dimension_numbers = #tpu.dot_dimension_numbers<[1], [0], [0], [1], [0, 0, 1, 1], [], []>} : vector<128x128xbf16>, vector<128x64xbf16>, vector<128x64xf32> -> vector<128x64xf32>
    %c0_21 = arith.constant 0 : index
    %c0_22 = arith.constant 0 : index
    %28 = vector.load %arg9[%c0_21, %c0_22] : memref<1x64xf32, #tpu.memory_space<vmem>>, vector<1x64xf32>
    %29 = vector.broadcast %28 : vector<1x64xf32> to vector<128x64xf32>
    %30 = arith.addf %27, %29 : vector<128x64xf32>
    %cst_23 = arith.constant 0.000000e+00 : f32
    %31 = vector.broadcast %cst_23 : f32 to vector<128x64xf32>
    %32 = arith.maximumf %30, %31 : vector<128x64xf32>
    %c0_24 = arith.constant 0 : index
    %c0_25 = arith.constant 0 : index
    %33 = vector.load %arg10[%c0_24, %c0_25] : memref<8x64xf32, #tpu.memory_space<vmem>>, vector<8x64xf32>
    %cst_26 = arith.constant dense<0.000000e+00> : vector<8x128xf32>
    %34 = tpu.matmul %33, %32, %cst_26 {dimension_numbers = #tpu.dot_dimension_numbers<[1], [1], [0], [0], [0, 0, 1, 0], [], []>} : vector<8x64xf32>, vector<128x64xf32>, vector<8x128xf32> -> vector<8x128xf32>
    %35 = vector.extract_strided_slice %34 {offsets = [0, 0], sizes = [1, 128], strides = [1, 1]} : vector<8x128xf32> to vector<1x128xf32>
    %c0_27 = arith.constant 0 : index
    %c0_28 = arith.constant 0 : index
    %36 = vector.load %arg11[%c0_27, %c0_28] : memref<1x1xf32, #tpu.memory_space<vmem>>, vector<1x1xf32>
    %37 = vector.broadcast %36 : vector<1x1xf32> to vector<1x128xf32>
    %38 = arith.addf %35, %37 : vector<1x128xf32>
    %cst_29 = arith.constant 0.000000e+00 : f32
    %39 = vector.broadcast %cst_29 : f32 to vector<1x128xf32>
    %40 = arith.subf %39, %38 : vector<1x128xf32>
    %41 = math.exp %40 : vector<1x128xf32>
    %cst_30 = arith.constant 1.000000e+00 : f32
    %42 = vector.broadcast %cst_30 : f32 to vector<1x128xf32>
    %43 = arith.addf %42, %41 : vector<1x128xf32>
    %44 = tpu.reciprocal %43 {approx = true} : vector<1x128xf32> -> vector<1x128xf32>
    %c0_31 = arith.constant 0 : index
    %c0_32 = arith.constant 0 : index
    %45 = vector.load %arg12[%c0_31, %c0_32] : memref<1x128xf32, #tpu.memory_space<vmem>>, vector<1x128xf32>
    tpu.vector_store %arg12[%c0_31, %c0_32], %44 {strides = array<i32>} : memref<1x128xf32, #tpu.memory_space<vmem>>, vector<1x128xf32>,
    return
  }
  func.func @transform_0(%arg0: i32) -> (i32, i32) {
    %c0_i32 = arith.constant 0 : i32
    %c0_i32_0 = arith.constant 0 : i32
    return %arg0, %c0_i32 : i32, i32
  }
  func.func @transform_1(%arg0: i32) -> (i32, i32) {
    %c0_i32 = arith.constant 0 : i32
    %c0_i32_0 = arith.constant 0 : i32
    %c0_i32_1 = arith.constant 0 : i32
    return %c0_i32, %c0_i32_0 : i32, i32
  }
  func.func @transform_2(%arg0: i32) -> (i32, i32) {
    %c0_i32 = arith.constant 0 : i32
    %c0_i32_0 = arith.constant 0 : i32
    %c0_i32_1 = arith.constant 0 : i32
    return %c0_i32, %c0_i32_0 : i32, i32
  }
  func.func @transform_3(%arg0: i32) -> (i32, i32) {
    %c0_i32 = arith.constant 0 : i32
    %c0_i32_0 = arith.constant 0 : i32
    %c0_i32_1 = arith.constant 0 : i32
    return %c0_i32, %c0_i32_0 : i32, i32
  }
  func.func @transform_4(%arg0: i32) -> (i32, i32) {
    %c0_i32 = arith.constant 0 : i32
    %c0_i32_0 = arith.constant 0 : i32
    %c0_i32_1 = arith.constant 0 : i32
    return %c0_i32, %c0_i32_0 : i32, i32
  }
  func.func @transform_5(%arg0: i32) -> (i32, i32) {
    %c0_i32 = arith.constant 0 : i32
    %c0_i32_0 = arith.constant 0 : i32
    %c0_i32_1 = arith.constant 0 : i32
    return %c0_i32, %c0_i32_0 : i32, i32
  }
  func.func @transform_6(%arg0: i32) -> (i32, i32) {
    %c0_i32 = arith.constant 0 : i32
    %c0_i32_0 = arith.constant 0 : i32
    %c0_i32_1 = arith.constant 0 : i32
    return %c0_i32, %c0_i32_0 : i32, i32
  }
  func.func @transform_7(%arg0: i32) -> (i32, i32) {
    %c0_i32 = arith.constant 0 : i32
    %c0_i32_0 = arith.constant 0 : i32
    %c0_i32_1 = arith.constant 0 : i32
    return %c0_i32, %c0_i32_0 : i32, i32
  }
  func.func @transform_8(%arg0: i32) -> (i32, i32) {
    %c0_i32 = arith.constant 0 : i32
    %c0_i32_0 = arith.constant 0 : i32
    %c0_i32_1 = arith.constant 0 : i32
    return %c0_i32, %c0_i32_0 : i32, i32
  }
  func.func @transform_9(%arg0: i32) -> (i32, i32) {
    %c0_i32 = arith.constant 0 : i32
    %c0_i32_0 = arith.constant 0 : i32
    %c0_i32_1 = arith.constant 0 : i32
    return %c0_i32, %c0_i32_0 : i32, i32
  }
  func.func @transform_10(%arg0: i32) -> (i32, i32) {
    %c0_i32 = arith.constant 0 : i32
    %c0_i32_0 = arith.constant 0 : i32
    %c0_i32_1 = arith.constant 0 : i32
    return %c0_i32, %c0_i32_0 : i32, i32
  }
  func.func @transform_11(%arg0: i32) -> (i32, i32) {
    %c0_i32 = arith.constant 0 : i32
    %c0_i32_0 = arith.constant 0 : i32
    return %c0_i32, %arg0 : i32, i32
  }
}

</mosaic_0001>

<llo_original>
// kernel: tpu_custom_call.1
$region0: #{tpu_custom_call.1}
  #allocation0 [shape = 'u32[]', space=smem, size = 0x4, offset = 0x4, fixed_abs, tag = 'smem constant byte address 0x4 - core index']
  #allocation1 [shape = 'u32[144,128]{1,0:T(1,128)}', space=vmem, size = 0x12000, scoped, tag = 'internal scratch']
  #allocation2 [shape = 'f32[1,1]{1,0:T(1,128)S(1)}', space=vmem, size = 0x200, scoped, tag = 'scoped memory for tpu_custom_call.1']
  %s0 = inlined_call_operand.vmem [shape: f32[200,32], index: 0, kind: input, shape index: {}]
  %s1 = inlined_call_operand.vmem [shape: bf16[32,32], index: 1, kind: input, shape index: {}]
  %s2 = inlined_call_operand.vmem [shape: f32[1,32], index: 2, kind: input, shape index: {}]
  %s3 = inlined_call_operand.vmem [shape: bf16[32,64], index: 3, kind: input, shape index: {}]
  %s4 = inlined_call_operand.vmem [shape: f32[1,64], index: 4, kind: input, shape index: {}]
  %s5 = inlined_call_operand.vmem [shape: bf16[64,128], index: 5, kind: input, shape index: {}]
  %s6 = inlined_call_operand.vmem [shape: f32[1,128], index: 6, kind: input, shape index: {}]
  %s7 = inlined_call_operand.vmem [shape: bf16[128,64], index: 7, kind: input, shape index: {}]
  %s8 = inlined_call_operand.vmem [shape: f32[1,64], index: 8, kind: input, shape index: {}]
  %s9 = inlined_call_operand.vmem [shape: f32[8,64], index: 9, kind: input, shape index: {}]
  %s10 = inlined_call_operand.<no memory space> [shape: f32[1,1], index: 10, kind: input, shape index: {}]
  %s11 = inlined_call_operand.hbm [shape: f32[1,256], index: 11, kind: output, shape index: {}]
  %s12 = sld [smem:[#allocation0]]
  $region77: #{tpu_custom_call.1} parent=0
    _
  %s14 = ssub.s32 1, %s12
  %s15 = scalar_select 0, %s14, %s12
  %v16 = vstv %s10
  %17 = vst [vmem:[#allocation2] sm:$0x1] %v16
  $region1: #{tpu_custom_call.1} parent=0
    #allocation3 [shape = 'u8[1024]{0}', space=vmem, size = 0x400, scoped, tag = 'output window, operand 0']
    #allocation4 [shape = 's32[2]{0}', space=sflag, size = 0x8, scoped, tag = 'scoped memory for tpu_custom_call.1']
    %18 = vsyncpa [#allocation4], 0
    %s19 = scalar_lea.sflag [#allocation4], 1
    %20 = vsyncpa %s19, 0
    loop: start=0, step=1, limit=4
    $region2: #{tpu_custom_call.1} parent=1 // loop_pre_header
      _
    $region3: #{tpu_custom_call.1} parent=1 // loop_header
      %s22 = sphi 0, %s26
      %p23 = scmp.ge.s32.totalorder %s22, 4
      %s32 = sphi 0, %s34
      %s35 = sphi 0, %s32
      %s36 = sphi 0, %s35
      %s52 = sphi 0, %s36
      %s56 = sphi 0, %s56
      %s58 = sphi 0, %s56
      %s59 = sphi 0, %s58
      %s73 = sphi 0, %s59
      %s77 = sphi 0, %s77
      %s79 = sphi 0, %s77
      %s80 = sphi 0, %s79
      %s94 = sphi 0, %s80
      %s98 = sphi 0, %s98
      %s100 = sphi 0, %s98
      %s101 = sphi 0, %s100
      %s115 = sphi 0, %s101
      %s119 = sphi 0, %s119
      %s121 = sphi 0, %s119
      %s122 = sphi 0, %s121
      %s136 = sphi 0, %s122
      %s140 = sphi 0, %s140
      %s142 = sphi 0, %s140
      %s143 = sphi 0, %s142
      %s157 = sphi 0, %s143
      %s161 = sphi 0, %s161
      %s163 = sphi 0, %s161
      %s164 = sphi 0, %s163
      %s178 = sphi 0, %s164
      %s182 = sphi 0, %s182
      %s184 = sphi 0, %s182
      %s185 = sphi 0, %s184
      %s199 = sphi 0, %s185
      %s203 = sphi 0, %s203
      %s205 = sphi 0, %s203
      %s206 = sphi 0, %s205
      %s220 = sphi 0, %s206
      %s224 = sphi 0, %s224
      %s226 = sphi 0, %s224
      %s227 = sphi 0, %s226
      %s241 = sphi 0, %s227
      %s245 = sphi 0, %s245
      %s247 = sphi 0, %s245
      %s248 = sphi 0, %s247
      %s262 = sphi 0, %s248
      %s268 = sphi 0, %s270
      %s271 = sphi 0, %s268
      %s272 = sphi 0, %s271
      %s288 = sphi 0, %s272
    $region4: #{tpu_custom_call.1} parent=1 // loop_header_branch
      %25 = sbr.rel (%p23) target = $region8
    $region5: #{tpu_custom_call.1} parent=1 // loop_body
      %s27 = ssub.s32 %s22, 1
      %s28 = ssub.s32 %s22, 2
      %s29 = sadd.s32 %s22, 1
      %s30 = ssub.s32 %s22, %s29
      %p31 = scmp.eq.s32.totalorder %s30, 0
      %s33 = sadd.s32 %s32, 1
      %s34 = scalar_select %p31, %s32, %s33
      %p37 = pneg %p31
      %p38 = scmp.eq.s32.totalorder %s22, 1
      %p39 = por %p37, %p38
      %p40 = scmp.ne.s32.totalorder %s32, %s35
      %p41 = scmp.eq.s32.totalorder %s22, 0
      %p42 = por %p40, %p41
      %p43 = scmp.ne.s32.totalorder %s32, %s35
      %p44 = scmp.eq.s32.totalorder %s27, 1
      %p45 = por %p43, %p44
      %p46 = scmp.ne.s32.totalorder %s35, %s36
      %p47 = scmp.eq.s32.totalorder %s27, 0
      %p48 = por %p46, %p47
      %p49 = scmp.ne.s32.totalorder %s35, %s36
      %p50 = scmp.eq.s32.totalorder %s28, 1
      %p51 = por %p49, %p50
      %p53 = scmp.ne.s32.totalorder %s36, %s52
      %p54 = scmp.eq.s32.totalorder %s28, 0
      %p55 = por %p53, %p54
      %s57 = sadd.s32 %s56, 1
      %p60 = scmp.eq.s32.totalorder %s22, 1
      %p61 = scmp.ne.s32.totalorder %s56, %s58
      %p62 = scmp.eq.s32.totalorder %s22, 0
      %p63 = por %p61, %p62
      %p64 = scmp.ne.s32.totalorder %s56, %s58
      %p65 = scmp.eq.s32.totalorder %s27, 1
      %p66 = por %p64, %p65
      %p67 = scmp.ne.s32.totalorder %s58, %s59
      %p68 = scmp.eq.s32.totalorder %s27, 0
      %p69 = por %p67, %p68
      %p70 = scmp.ne.s32.totalorder %s58, %s59
      %p71 = scmp.eq.s32.totalorder %s28, 1
      %p72 = por %p70, %p71
      %p74 = scmp.ne.s32.totalorder %s59, %s73
      %p75 = scmp.eq.s32.totalorder %s28, 0
      %p76 = por %p74, %p75
      %s78 = sadd.s32 %s77, 1
      %p81 = scmp.eq.s32.totalorder %s22, 1
      %p82 = scmp.ne.s32.totalorder %s77, %s79
      %p83 = scmp.eq.s32.totalorder %s22, 0
      %p84 = por %p82, %p83
      %p85 = scmp.ne.s32.totalorder %s77, %s79
      %p86 = scmp.eq.s32.totalorder %s27, 1
      %p87 = por %p85, %p86
      %p88 = scmp.ne.s32.totalorder %s79, %s80
      %p89 = scmp.eq.s32.totalorder %s27, 0
      %p90 = por %p88, %p89
      %p91 = scmp.ne.s32.totalorder %s79, %s80
      %p92 = scmp.eq.s32.totalorder %s28, 1
      %p93 = por %p91, %p92
      %p95 = scmp.ne.s32.totalorder %s80, %s94
      %p96 = scmp.eq.s32.totalorder %s28, 0
      %p97 = por %p95, %p96
      %s99 = sadd.s32 %s98, 1
      %p102 = scmp.eq.s32.totalorder %s22, 1
      %p103 = scmp.ne.s32.totalorder %s98, %s100
      %p104 = scmp.eq.s32.totalorder %s22, 0
      %p105 = por %p103, %p104
      %p106 = scmp.ne.s32.totalorder %s98, %s100
      %p107 = scmp.eq.s32.totalorder %s27, 1
      %p108 = por %p106, %p107
      %p109 = scmp.ne.s32.totalorder %s100, %s101
      %p110 = scmp.eq.s32.totalorder %s27, 0
      %p111 = por %p109, %p110
      %p112 = scmp.ne.s32.totalorder %s100, %s101
      %p113 = scmp.eq.s32.totalorder %s28, 1
      %p114 = por %p112, %p113
      %p116 = scmp.ne.s32.totalorder %s101, %s115
      %p117 = scmp.eq.s32.totalorder %s28, 0
      %p118 = por %p116, %p117
      %s120 = sadd.s32 %s119, 1
      %p123 = scmp.eq.s32.totalorder %s22, 1
      %p124 = scmp.ne.s32.totalorder %s119, %s121
      %p125 = scmp.eq.s32.totalorder %s22, 0
      %p126 = por %p124, %p125
      %p127 = scmp.ne.s32.totalorder %s119, %s121
      %p128 = scmp.eq.s32.totalorder %s27, 1
      %p129 = por %p127, %p128
      %p130 = scmp.ne.s32.totalorder %s121, %s122
      %p131 = scmp.eq.s32.totalorder %s27, 0
      %p132 = por %p130, %p131
      %p133 = scmp.ne.s32.totalorder %s121, %s122
      %p134 = scmp.eq.s32.totalorder %s28, 1
      %p135 = por %p133, %p134
      %p137 = scmp.ne.s32.totalorder %s122, %s136
      %p138 = scmp.eq.s32.totalorder %s28, 0
      %p139 = por %p137, %p138
      %s141 = sadd.s32 %s140, 1
      %p144 = scmp.eq.s32.totalorder %s22, 1
      %p145 = scmp.ne.s32.totalorder %s140, %s142
      %p146 = scmp.eq.s32.totalorder %s22, 0
      %p147 = por %p145, %p146
      %p148 = scmp.ne.s32.totalorder %s140, %s142
      %p149 = scmp.eq.s32.totalorder %s27, 1
      %p150 = por %p148, %p149
      %p151 = scmp.ne.s32.totalorder %s142, %s143
      %p152 = scmp.eq.s32.totalorder %s27, 0
      %p153 = por %p151, %p152
      %p154 = scmp.ne.s32.totalorder %s142, %s143
      %p155 = scmp.eq.s32.totalorder %s28, 1
      %p156 = por %p154, %p155
      %p158 = scmp.ne.s32.totalorder %s143, %s157
      %p159 = scmp.eq.s32.totalorder %s28, 0
      %p160 = por %p158, %p159
      %s162 = sadd.s32 %s161, 1
      %p165 = scmp.eq.s32.totalorder %s22, 1
      %p166 = scmp.ne.s32.totalorder %s161, %s163
      %p167 = scmp.eq.s32.totalorder %s22, 0
      %p168 = por %p166, %p167
      %p169 = scmp.ne.s32.totalorder %s161, %s163
      %p170 = scmp.eq.s32.totalorder %s27, 1
      %p171 = por %p169, %p170
      %p172 = scmp.ne.s32.totalorder %s163, %s164
      %p173 = scmp.eq.s32.totalorder %s27, 0
      %p174 = por %p172, %p173
      %p175 = scmp.ne.s32.totalorder %s163, %s164
      %p176 = scmp.eq.s32.totalorder %s28, 1
      %p177 = por %p175, %p176
      %p179 = scmp.ne.s32.totalorder %s164, %s178
      %p180 = scmp.eq.s32.totalorder %s28, 0
      %p181 = por %p179, %p180
      %s183 = sadd.s32 %s182, 1
      %p186 = scmp.eq.s32.totalorder %s22, 1
      %p187 = scmp.ne.s32.totalorder %s182, %s184
      %p188 = scmp.eq.s32.totalorder %s22, 0
      %p189 = por %p187, %p188
      %p190 = scmp.ne.s32.totalorder %s182, %s184
      %p191 = scmp.eq.s32.totalorder %s27, 1
      %p192 = por %p190, %p191
      %p193 = scmp.ne.s32.totalorder %s184, %s185
      %p194 = scmp.eq.s32.totalorder %s27, 0
      %p195 = por %p193, %p194
      %p196 = scmp.ne.s32.totalorder %s184, %s185
      %p197 = scmp.eq.s32.totalorder %s28, 1
      %p198 = por %p196, %p197
      %p200 = scmp.ne.s32.totalorder %s185, %s199
      %p201 = scmp.eq.s32.totalorder %s28, 0
      %p202 = por %p200, %p201
      %s204 = sadd.s32 %s203, 1
      %p207 = scmp.eq.s32.totalorder %s22, 1
      %p208 = scmp.ne.s32.totalorder %s203, %s205
      %p209 = scmp.eq.s32.totalorder %s22, 0
      %p210 = por %p208, %p209
      %p211 = scmp.ne.s32.totalorder %s203, %s205
      %p212 = scmp.eq.s32.totalorder %s27, 1
      %p213 = por %p211, %p212
      %p214 = scmp.ne.s32.totalorder %s205, %s206
      %p215 = scmp.eq.s32.totalorder %s27, 0
      %p216 = por %p214, %p215
      %p217 = scmp.ne.s32.totalorder %s205, %s206
      %p218 = scmp.eq.s32.totalorder %s28, 1
      %p219 = por %p217, %p218
      %p221 = scmp.ne.s32.totalorder %s206, %s220
      %p222 = scmp.eq.s32.totalorder %s28, 0
      %p223 = por %p221, %p222
      %s225 = sadd.s32 %s224, 1
      %p228 = scmp.eq.s32.totalorder %s22, 1
      %p229 = scmp.ne.s32.totalorder %s224, %s226
      %p230 = scmp.eq.s32.totalorder %s22, 0
      %p231 = por %p229, %p230
      %p232 = scmp.ne.s32.totalorder %s224, %s226
      %p233 = scmp.eq.s32.totalorder %s27, 1
      %p234 = por %p232, %p233
      %p235 = scmp.ne.s32.totalorder %s226, %s227
      %p236 = scmp.eq.s32.totalorder %s27, 0
      %p237 = por %p235, %p236
      %p238 = scmp.ne.s32.totalorder %s226, %s227
      %p239 = scmp.eq.s32.totalorder %s28, 1
      %p240 = por %p238, %p239
      %p242 = scmp.ne.s32.totalorder %s227, %s241
      %p243 = scmp.eq.s32.totalorder %s28, 0
      %p244 = por %p242, %p243
      %s246 = sadd.s32 %s245, 1
      %p249 = scmp.eq.s32.totalorder %s22, 1
      %p250 = scmp.ne.s32.totalorder %s245, %s247
      %p251 = scmp.eq.s32.totalorder %s22, 0
      %p252 = por %p250, %p251
      %p253 = scmp.ne.s32.totalorder %s245, %s247
      %p254 = scmp.eq.s32.totalorder %s27, 1
      %p255 = por %p253, %p254
      %p256 = scmp.ne.s32.totalorder %s247, %s248
      %p257 = scmp.eq.s32.totalorder %s27, 0
      %p258 = por %p256, %p257
      %p259 = scmp.ne.s32.totalorder %s247, %s248
      %p260 = scmp.eq.s32.totalorder %s28, 1
      %p261 = por %p259, %p260
      %p263 = scmp.ne.s32.totalorder %s248, %s262
      %p264 = scmp.eq.s32.totalorder %s28, 0
      %p265 = por %p263, %p264
      %s266 = ssub.s32 %s22, %s29
      %p267 = scmp.eq.s32.totalorder %s266, 0
      %s269 = sadd.s32 %s268, 1
      %s270 = scalar_select %p267, %s268, %s269
      %p273 = pneg %p267
      %p274 = scmp.eq.s32.totalorder %s22, 1
      %p275 = por %p273, %p274
      %p276 = scmp.ne.s32.totalorder %s268, %s271
      %p277 = scmp.eq.s32.totalorder %s22, 0
      %p278 = por %p276, %p277
      %p279 = scmp.ne.s32.totalorder %s268, %s271
      %p280 = scmp.eq.s32.totalorder %s27, 1
      %p281 = por %p279, %p280
      %p282 = scmp.ne.s32.totalorder %s271, %s272
      %p283 = scmp.eq.s32.totalorder %s27, 0
      %p284 = por %p282, %p283
      %p285 = scmp.ne.s32.totalorder %s271, %s272
      %p286 = scmp.eq.s32.totalorder %s28, 1
      %p287 = por %p285, %p286
      %p289 = scmp.ne.s32.totalorder %s272, %s288
      %p290 = scmp.eq.s32.totalorder %s28, 0
      %p291 = por %p289, %p290
      %p292 = scmp.le.s32.totalorder 1, %s22
      %p293 = scmp.lt.s32.totalorder %s22, 3
      %p294 = pnand %p292, %p293
      %p295 = pneg %p294
      // Predicated region
      $region9: #{tpu_custom_call.1} parent=5 // pred_check
        _
      $region10: #{tpu_custom_call.1} parent=5 // pred_check_branch
        %297 = sbr.rel (%p294) target = $region12
      $region11: #{tpu_custom_call.1} parent=5 // pred_region
        %s298 = ssub.s32 %s22, 1
        // Predicated region
        $region13: #{tpu_custom_call.1} parent=11 // pred_check
          %p299 = pneg %p69
        $region14: #{tpu_custom_call.1} parent=11 // pred_check_branch
          %301 = sbr.rel (%p299) target = $region16
        $region15: #{tpu_custom_call.1} parent=11 // pred_region
          _
        $region16: #{tpu_custom_call.1} parent=11 // pred_fallthru
          _
        // Predicated region
        $region17: #{tpu_custom_call.1} parent=11 // pred_check
          %p302 = pneg %p90
        $region18: #{tpu_custom_call.1} parent=11 // pred_check_branch
          %304 = sbr.rel (%p302) target = $region20
        $region19: #{tpu_custom_call.1} parent=11 // pred_region
          _
        $region20: #{tpu_custom_call.1} parent=11 // pred_fallthru
          _
        // Predicated region
        $region21: #{tpu_custom_call.1} parent=11 // pred_check
          %p305 = pneg %p111
        $region22: #{tpu_custom_call.1} parent=11 // pred_check_branch
          %307 = sbr.rel (%p305) target = $region24
        $region23: #{tpu_custom_call.1} parent=11 // pred_region
          _
        $region24: #{tpu_custom_call.1} parent=11 // pred_fallthru
          _
        // Predicated region
        $region25: #{tpu_custom_call.1} parent=11 // pred_check
          %p308 = pneg %p132
        $region26: #{tpu_custom_call.1} parent=11 // pred_check_branch
          %310 = sbr.rel (%p308) target = $region28
        $region27: #{tpu_custom_call.1} parent=11 // pred_region
          _
        $region28: #{tpu_custom_call.1} parent=11 // pred_fallthru
          _
        // Predicated region
        $region29: #{tpu_custom_call.1} parent=11 // pred_check
          %p311 = pneg %p153
        $region30: #{tpu_custom_call.1} parent=11 // pred_check_branch
          %313 = sbr.rel (%p311) target = $region32
        $region31: #{tpu_custom_call.1} parent=11 // pred_region
          _
        $region32: #{tpu_custom_call.1} parent=11 // pred_fallthru
          _
        // Predicated region
        $region33: #{tpu_custom_call.1} parent=11 // pred_check
          %p314 = pneg %p174
        $region34: #{tpu_custom_call.1} parent=11 // pred_check_branch
          %316 = sbr.rel (%p314) target = $region36
        $region35: #{tpu_custom_call.1} parent=11 // pred_region
          _
        $region36: #{tpu_custom_call.1} parent=11 // pred_fallthru
          _
        // Predicated region
        $region37: #{tpu_custom_call.1} parent=11 // pred_check
          %p317 = pneg %p195
        $region38: #{tpu_custom_call.1} parent=11 // pred_check_branch
          %319 = sbr.rel (%p317) target = $region40
        $region39: #{tpu_custom_call.1} parent=11 // pred_region
          _
        $region40: #{tpu_custom_call.1} parent=11 // pred_fallthru
          _
        // Predicated region
        $region41: #{tpu_custom_call.1} parent=11 // pred_check
          %p320 = pneg %p216
        $region42: #{tpu_custom_call.1} parent=11 // pred_check_branch
          %322 = sbr.rel (%p320) target = $region44
        $region43: #{tpu_custom_call.1} parent=11 // pred_region
          _
        $region44: #{tpu_custom_call.1} parent=11 // pred_fallthru
          _
        // Predicated region
        $region45: #{tpu_custom_call.1} parent=11 // pred_check
          %p323 = pneg %p237
        $region46: #{tpu_custom_call.1} parent=11 // pred_check_branch
          %325 = sbr.rel (%p323) target = $region48
        $region47: #{tpu_custom_call.1} parent=11 // pred_region
          _
        $region48: #{tpu_custom_call.1} parent=11 // pred_fallthru
          _
        // Predicated region
        $region49: #{tpu_custom_call.1} parent=11 // pred_check
          %p326 = pneg %p258
        $region50: #{tpu_custom_call.1} parent=11 // pred_check_branch
          %328 = sbr.rel (%p326) target = $region52
        $region51: #{tpu_custom_call.1} parent=11 // pred_region
          _
        $region52: #{tpu_custom_call.1} parent=11 // pred_fallthru
          _
      $region12: #{tpu_custom_call.1} parent=5 // pred_fallthru
        _
      %p329 = scmp.lt.s32.totalorder %s22, 2
      // Predicated region
      $region53: #{tpu_custom_call.1} parent=5 // pred_check
        %p330 = pneg %p329
      $region54: #{tpu_custom_call.1} parent=5 // pred_check_branch
        %332 = sbr.rel (%p330) target = $region56
      $region55: #{tpu_custom_call.1} parent=5 // pred_region
        // Predicated region
        $region57: #{tpu_custom_call.1} parent=55 // pred_check
          %p333 = pneg %p42
        $region58: #{tpu_custom_call.1} parent=55 // pred_check_branch
          %335 = sbr.rel (%p333) target = $region60
        $region59: #{tpu_custom_call.1} parent=55 // pred_region
          %s336 = smul.u32 16, %s22
          %s337 = ssub.s32 25, %s336
          %p338 = scmp.lt.s32.totalorder %s337, 16
          %s339 = scalar_select %p338, %s337, 16
          %s340 = smul.u32 128, %s339
          %p341 = scmp.lt.s32.totalorder %s336, 24
          %s342 = scalar_select %p341, %s336, 24
          %s343 = smul.addr %s342, 8
          %s344 = scalar_lea.vmem %s0, %s343
          %s345 = smul.u32 16, %s22
          %s346 = ssub.s32 25, %s345
          %p347 = scmp.lt.s32.totalorder %s346, 16
          %s348 = scalar_select %p347, %s346, 16
          %s349 = smul.u32 128, %s348
        $region60: #{tpu_custom_call.1} parent=55 // pred_fallthru
          _
      $region56: #{tpu_custom_call.1} parent=5 // pred_fallthru
        _
      %p350 = scmp.le.s32.totalorder 1, %s22
      %p351 = scmp.lt.s32.totalorder %s22, 3
      %p352 = pnand %p350, %p351
      %p353 = pneg %p352
      // Predicated region
      $region61: #{tpu_custom_call.1} parent=5 // pred_check
        _
      $region62: #{tpu_custom_call.1} parent=5 // pred_check_branch
        %355 = sbr.rel (%p352) target = $region64
      $region63: #{tpu_custom_call.1} parent=5 // pred_region
        %s356 = ssub.s32 %s22, 1
        %s357 = smul.u32 16, %s27
        %s358 = ssub.s32 25, %s357
        %p359 = scmp.lt.s32.totalorder %s358, 16
        %s360 = scalar_select %p359, %s358, 16
        %s361 = smul.u32 128, %s360
        %p362 = scmp.lt.s32.totalorder %s357, 24
        %s363 = scalar_select %p362, %s357, 24
        %s364 = smul.addr %s363, 8
        %s365 = scalar_lea.vmem %s0, %s364
        %p366 = pneg %p48
        %p367 = pneg %p45
        %p368 = pneg %p69
        %p369 = pneg %p66
        %p370 = pneg %p90
        %p371 = pneg %p87
        %p372 = pneg %p111
        %p373 = pneg %p108
        %p374 = pneg %p132
        %p375 = pneg %p129
        %p376 = pneg %p153
        %p377 = pneg %p150
        %p378 = pneg %p174
        %p379 = pneg %p171
        %p380 = pneg %p195
        %p381 = pneg %p192
        %p382 = pneg %p216
        %p383 = pneg %p213
        %p384 = pneg %p237
        %p385 = pneg %p234
        %p386 = pneg %p258
        %p387 = pneg %p255
        %p388 = pneg %p284
        %p389 = pneg %p281
        %s390 = sand.u32 %s271, 1
        %s391 = scalar_lea.sflag [#allocation4], %s390
        %s392 = sand.u32 %s271, 1
        %s393 = scalar_lea.vmem [#allocation3], %s392
        %s394 = smul.u32 16, %s27
        %s395 = ssub.s32 25, %s394
        %p396 = scmp.lt.s32.totalorder %s395, 16
        %s397 = scalar_select %p396, %s395, 16
        %s398 = smul.u32 128, %s397
        %p399 = scmp.lt.s32.totalorder %s394, 24
        %s400 = scalar_select %p399, %s394, 24
        %s401 = smul.addr %s400, 8
        %s402 = scalar_lea.vmem %s0, %s401
        %s403 = smul.u32 16, %s27
        %s404 = ssub.s32 25, %s403
        %p405 = scmp.lt.s32.totalorder %s404, 16
        %s406 = scalar_select %p405, %s404, 16
        %s407 = smul.u32 128, %s406
        %v409 = vld [vmem:[%s402] sm:$0xff]
        %v410 = vld [vmem:[%s402 + $0x8] sm:$0xff]
        %v411 = vld [vmem:[%s402 + $0x10] sm:$0xff]
        %v412 = vld [vmem:[%s402 + $0x18] sm:$0xff]
        %v413 = vld [vmem:[%s402 + $0x20] sm:$0xff]
        %v414 = vld [vmem:[%s402 + $0x28] sm:$0xff]
        %v415 = vld [vmem:[%s402 + $0x30] sm:$0xff]
        %v416 = vld [vmem:[%s402 + $0x38] sm:$0xff]
        %v417 = vld [vmem:[%s402 + $0x40] sm:$0xff]
        %v418 = vld [vmem:[%s402 + $0x48] sm:$0xff]
        %v419 = vld [vmem:[%s402 + $0x50] sm:$0xff]
        %v420 = vld [vmem:[%s402 + $0x58] sm:$0xff]
        %v421 = vld [vmem:[%s402 + $0x60] sm:$0xff]
        %v422 = vld [vmem:[%s402 + $0x68] sm:$0xff]
        %v423 = vld [vmem:[%s402 + $0x70] sm:$0xff]
        %v424 = vld [vmem:[%s402 + $0x78] sm:$0xff]
        %v425 = vpack.c.bf16 %v410, %v409
        %v426 = vpack.c.bf16 %v412, %v411
        %v427 = vpack.c.bf16 %v414, %v413
        %v428 = vpack.c.bf16 %v416, %v415
        %v429 = vpack.c.bf16 %v418, %v417
        %v430 = vpack.c.bf16 %v420, %v419
        %v431 = vpack.c.bf16 %v422, %v421
        %v432 = vpack.c.bf16 %v424, %v423
        %v433 = vld [vmem:[%s1] sm:$0xf]
        %v434 = vld [vmem:[%s1 + $0x4] sm:$0xf]
        %v435 = vld [vmem:[%s1 + $0x8] sm:$0xf]
        %v436 = vld [vmem:[%s1 + $0xc] sm:$0xf]
        %v437 = vld [vmem:[%s2] sm:$0x1]
        %v439 = vlaneseq
        %v440 = vshrl.u32 %v439, 7
        %v441 = vsub.s32 0, %v440
        %v442 = vrot.slane %v437, %v441
        %v448 = vunpack.c.l.b16 %v433
        %v449 = vunpack.c.l.b16 %v434
        %v450 = vunpack.c.l.b16 %v435
        %v451 = vunpack.c.l.b16 %v436
        %v452 = vpack.c.b16 %v449, %v448
        %v453 = vpack.c.b16 %v451, %v450
        %vm456 = vcmask 261120
        %v458 = vsel %vm456, %v425, 0
        %v461 = vsel %vm456, %v426, 0
        %v464 = vsel %vm456, %v427, 0
        %v467 = vsel %vm456, %v428, 0
        %v470 = vsel %vm456, %v429, 0
        %v473 = vsel %vm456, %v430, 0
        %v476 = vsel %vm456, %v431, 0
        %v479 = vsel %vm456, %v432, 0
        %481 = vmatprep.subr.bf16.mxu0 0
        %482 = vmatpush1.bf16.msra.mxu0 0
        %483 = vmatprep.subr.bf16.mxu0 0
        %484 = vmatpush1.bf16.msra.mxu0 0
        %485 = vmatprep.subr.bf16.mxu0 0
        %486 = vmatpush1.bf16.msra.mxu0 0
        %487 = vmatprep.subr.bf16.mxu0 0
        %488 = vmatpush1.bf16.msra.mxu0 0
        %489 = vmatprep.subr.bf16.mxu0 0
        %490 = vmatpush1.bf16.msra.mxu0 0
        %491 = vmatprep.subr.bf16.mxu0 0
        %492 = vmatpush1.bf16.msra.mxu0 0
        %493 = vmatprep.subr.bf16.mxu0 0
        %494 = vmatpush1.bf16.msra.mxu0 %v453
        %495 = vmatprep.subr.bf16.mxu0 0
        %496 = vmatpush1.bf16.msra.mxu0 %v452
        %497 = vmatprep.subr.bf16.mxu0 0
        %498 = vmatpush2.bf16.msra.mxu0 0
        %499 = vmatprep.subr.bf16.mxu0 0
        %500 = vmatpush2.bf16.msra.mxu0 0
        %501 = vmatprep.subr.bf16.mxu0 0
        %502 = vmatpush2.bf16.msra.mxu0 0
        %503 = vmatprep.subr.bf16.mxu0 0
        %504 = vmatpush2.bf16.msra.mxu0 0
        %505 = vmatprep.subr.bf16.mxu0 0
        %506 = vmatpush2.bf16.msra.mxu0 0
        %507 = vmatprep.subr.bf16.mxu0 0
        %508 = vmatpush2.bf16.msra.mxu0 0
        %509 = vmatprep.subr.bf16.mxu0 0
        %510 = vmatpush2.bf16.msra.mxu0 0
        %511 = vmatprep.subr.bf16.mxu0 0
        %512 = vmatpush2.bf16.msra.mxu0 0
        %513 = vmatprep.mubr.bf16.mxu0 0
        %514 = vmatmul.mubr.bf16.gmra.mxu0 %v458
        %v515 = vpop.f32.mrf.mxu0
        %v516 = vadd.f32 %v442, %v515
        %v517 = vpop.f32.mrf.mxu0
        %v518 = vpop.f32.mrf.mxu0
        %v519 = vadd.f32 %v442, %v518
        %v520 = vpop.f32.mrf.mxu0
        %521 = vmatprep.mubr.bf16.mxu0 0
        %522 = vmatmul.mubr.bf16.gmra.mxu0 %v461
        %v523 = vpop.f32.mrf.mxu0
        %v524 = vadd.f32 %v442, %v523
        %v525 = vpop.f32.mrf.mxu0
        %v526 = vpop.f32.mrf.mxu0
        %v527 = vadd.f32 %v442, %v526
        %v528 = vpop.f32.mrf.mxu0
        %529 = vmatprep.mubr.bf16.mxu0 0
        %530 = vmatmul.mubr.bf16.gmra.mxu0 %v464
        %v531 = vpop.f32.mrf.mxu0
        %v532 = vadd.f32 %v442, %v531
        %v533 = vpop.f32.mrf.mxu0
        %v534 = vpop.f32.mrf.mxu0
        %v535 = vadd.f32 %v442, %v534
        %v536 = vpop.f32.mrf.mxu0
        %537 = vmatprep.mubr.bf16.mxu0 0
        %538 = vmatmul.mubr.bf16.gmra.mxu0 %v467
        %v539 = vpop.f32.mrf.mxu0
        %v540 = vadd.f32 %v442, %v539
        %v541 = vpop.f32.mrf.mxu0
        %v542 = vpop.f32.mrf.mxu0
        %v543 = vadd.f32 %v442, %v542
        %v544 = vpop.f32.mrf.mxu0
        %545 = vmatprep.mubr.bf16.mxu0 0
        %546 = vmatmul.mubr.bf16.gmra.mxu0 %v470
        %v547 = vpop.f32.mrf.mxu0
        %v548 = vadd.f32 %v442, %v547
        %v549 = vpop.f32.mrf.mxu0
        %v550 = vpop.f32.mrf.mxu0
        %v551 = vadd.f32 %v442, %v550
        %v552 = vpop.f32.mrf.mxu0
        %553 = vmatprep.mubr.bf16.mxu0 0
        %554 = vmatmul.mubr.bf16.gmra.mxu0 %v473
        %v555 = vpop.f32.mrf.mxu0
        %v556 = vadd.f32 %v442, %v555
        %v557 = vpop.f32.mrf.mxu0
        %v558 = vpop.f32.mrf.mxu0
        %v559 = vadd.f32 %v442, %v558
        %v560 = vpop.f32.mrf.mxu0
        %561 = vmatprep.mubr.bf16.mxu0 0
        %562 = vmatmul.mubr.bf16.gmra.mxu0 %v476
        %v563 = vpop.f32.mrf.mxu0
        %v564 = vadd.f32 %v442, %v563
        %v565 = vpop.f32.mrf.mxu0
        %v566 = vpop.f32.mrf.mxu0
        %v567 = vadd.f32 %v442, %v566
        %v568 = vpop.f32.mrf.mxu0
        %569 = vmatprep.mubr.bf16.mxu0 0
        %570 = vmatmul.mubr.bf16.gmra.mxu0 %v479
        %v571 = vpop.f32.mrf.mxu0
        %v572 = vadd.f32 %v442, %v571
        %v573 = vpop.f32.mrf.mxu0
        %v574 = vpop.f32.mrf.mxu0
        %v575 = vadd.f32 %v442, %v574
        %v576 = vpop.f32.mrf.mxu0
        %577 = vdwg.mxu0
        %v578 = vmax.f32 %v516, 0.0
        %v579 = vmax.f32 %v519, 0.0
        %v580 = vmax.f32 %v524, 0.0
        %v581 = vmax.f32 %v527, 0.0
        %v582 = vmax.f32 %v532, 0.0
        %v583 = vmax.f32 %v535, 0.0
        %v584 = vmax.f32 %v540, 0.0
        %v585 = vmax.f32 %v543, 0.0
        %v586 = vmax.f32 %v548, 0.0
        %v587 = vmax.f32 %v551, 0.0
        %v588 = vmax.f32 %v556, 0.0
        %v589 = vmax.f32 %v559, 0.0
        %v590 = vmax.f32 %v564, 0.0
        %v591 = vmax.f32 %v567, 0.0
        %v592 = vmax.f32 %v572, 0.0
        %v593 = vmax.f32 %v575, 0.0
        %v594 = vpack.c.bf16 %v579, %v578
        %v595 = vpack.c.bf16 %v581, %v580
        %v596 = vpack.c.bf16 %v583, %v582
        %v597 = vpack.c.bf16 %v585, %v584
        %v598 = vpack.c.bf16 %v587, %v586
        %v599 = vpack.c.bf16 %v589, %v588
        %v600 = vpack.c.bf16 %v591, %v590
        %v601 = vpack.c.bf16 %v593, %v592
        %v602 = vld [vmem:[%s3] sm:$0xf]
        %v603 = vld [vmem:[%s3 + $0x4] sm:$0xf]
        %v604 = vld [vmem:[%s3 + $0x8] sm:$0xf]
        %v605 = vld [vmem:[%s3 + $0xc] sm:$0xf]
        %v606 = vld [vmem:[%s4] sm:$0x1]
        %v608 = vlaneseq
        %v609 = vshrl.u32 %v608, 7
        %v610 = vsub.s32 0, %v609
        %v611 = vrot.slane %v606, %v610
        %v617 = vunpack.c.l.b16 %v602
        %v618 = vunpack.c.l.b16 %v603
        %v619 = vunpack.c.l.b16 %v604
        %v620 = vunpack.c.l.b16 %v605
        %v621 = vpack.c.b16 %v618, %v617
        %v622 = vpack.c.b16 %v620, %v619
        %v626 = vsel %vm456, %v594, 0
        %v629 = vsel %vm456, %v595, 0
        %v632 = vsel %vm456, %v596, 0
        %v635 = vsel %vm456, %v597, 0
        %v638 = vsel %vm456, %v598, 0
        %v641 = vsel %vm456, %v599, 0
        %v644 = vsel %vm456, %v600, 0
        %v647 = vsel %vm456, %v601, 0
        %649 = vmatprep.subr.bf16.mxu0 0
        %650 = vmatpush1.bf16.msra.mxu0 0
        %651 = vmatprep.subr.bf16.mxu0 0
        %652 = vmatpush1.bf16.msra.mxu0 0
        %653 = vmatprep.subr.bf16.mxu0 0
        %654 = vmatpush1.bf16.msra.mxu0 0
        %655 = vmatprep.subr.bf16.mxu0 0
        %656 = vmatpush1.bf16.msra.mxu0 0
        %657 = vmatprep.subr.bf16.mxu0 0
        %658 = vmatpush1.bf16.msra.mxu0 0
        %659 = vmatprep.subr.bf16.mxu0 0
        %660 = vmatpush1.bf16.msra.mxu0 0
        %661 = vmatprep.subr.bf16.mxu0 0
        %662 = vmatpush1.bf16.msra.mxu0 %v622
        %663 = vmatprep.subr.bf16.mxu0 0
        %664 = vmatpush1.bf16.msra.mxu0 %v621
        %665 = vmatprep.subr.bf16.mxu0 0
        %666 = vmatpush2.bf16.msra.mxu0 0
        %667 = vmatprep.subr.bf16.mxu0 0
        %668 = vmatpush2.bf16.msra.mxu0 0
        %669 = vmatprep.subr.bf16.mxu0 0
        %670 = vmatpush2.bf16.msra.mxu0 0
        %671 = vmatprep.subr.bf16.mxu0 0
        %672 = vmatpush2.bf16.msra.mxu0 0
        %673 = vmatprep.subr.bf16.mxu0 0
        %674 = vmatpush2.bf16.msra.mxu0 0
        %675 = vmatprep.subr.bf16.mxu0 0
        %676 = vmatpush2.bf16.msra.mxu0 0
        %677 = vmatprep.subr.bf16.mxu0 0
        %678 = vmatpush2.bf16.msra.mxu0 0
        %679 = vmatprep.subr.bf16.mxu0 0
        %680 = vmatpush2.bf16.msra.mxu0 0
        %681 = vmatprep.mubr.bf16.mxu0 0
        %682 = vmatmul.mubr.bf16.gmra.mxu0 %v626
        %v683 = vpop.f32.mrf.mxu0
        %v684 = vadd.f32 %v611, %v683
        %v685 = vpop.f32.mrf.mxu0
        %v686 = vpop.f32.mrf.mxu0
        %v687 = vadd.f32 %v611, %v686
        %v688 = vpop.f32.mrf.mxu0
        %689 = vmatprep.mubr.bf16.mxu0 0
        %690 = vmatmul.mubr.bf16.gmra.mxu0 %v629
        %v691 = vpop.f32.mrf.mxu0
        %v692 = vadd.f32 %v611, %v691
        %v693 = vpop.f32.mrf.mxu0
        %v694 = vpop.f32.mrf.mxu0
        %v695 = vadd.f32 %v611, %v694
        %v696 = vpop.f32.mrf.mxu0
        %697 = vmatprep.mubr.bf16.mxu0 0
        %698 = vmatmul.mubr.bf16.gmra.mxu0 %v632
        %v699 = vpop.f32.mrf.mxu0
        %v700 = vadd.f32 %v611, %v699
        %v701 = vpop.f32.mrf.mxu0
        %v702 = vpop.f32.mrf.mxu0
        %v703 = vadd.f32 %v611, %v702
        %v704 = vpop.f32.mrf.mxu0
        %705 = vmatprep.mubr.bf16.mxu0 0
        %706 = vmatmul.mubr.bf16.gmra.mxu0 %v635
        %v707 = vpop.f32.mrf.mxu0
        %v708 = vadd.f32 %v611, %v707
        %v709 = vpop.f32.mrf.mxu0
        %v710 = vpop.f32.mrf.mxu0
        %v711 = vadd.f32 %v611, %v710
        %v712 = vpop.f32.mrf.mxu0
        %713 = vmatprep.mubr.bf16.mxu0 0
        %714 = vmatmul.mubr.bf16.gmra.mxu0 %v638
        %v715 = vpop.f32.mrf.mxu0
        %v716 = vadd.f32 %v611, %v715
        %v717 = vpop.f32.mrf.mxu0
        %v718 = vpop.f32.mrf.mxu0
        %v719 = vadd.f32 %v611, %v718
        %v720 = vpop.f32.mrf.mxu0
        %721 = vmatprep.mubr.bf16.mxu0 0
        %722 = vmatmul.mubr.bf16.gmra.mxu0 %v641
        %v723 = vpop.f32.mrf.mxu0
        %v724 = vadd.f32 %v611, %v723
        %v725 = vpop.f32.mrf.mxu0
        %v726 = vpop.f32.mrf.mxu0
        %v727 = vadd.f32 %v611, %v726
        %v728 = vpop.f32.mrf.mxu0
        %729 = vmatprep.mubr.bf16.mxu0 0
        %730 = vmatmul.mubr.bf16.gmra.mxu0 %v644
        %v731 = vpop.f32.mrf.mxu0
        %v732 = vadd.f32 %v611, %v731
        %v733 = vpop.f32.mrf.mxu0
        %v734 = vpop.f32.mrf.mxu0
        %v735 = vadd.f32 %v611, %v734
        %v736 = vpop.f32.mrf.mxu0
        %737 = vmatprep.mubr.bf16.mxu0 0
        %738 = vmatmul.mubr.bf16.gmra.mxu0 %v647
        %v739 = vpop.f32.mrf.mxu0
        %v740 = vadd.f32 %v611, %v739
        %v741 = vpop.f32.mrf.mxu0
        %v742 = vpop.f32.mrf.mxu0
        %v743 = vadd.f32 %v611, %v742
        %v744 = vpop.f32.mrf.mxu0
        %745 = vdwg.mxu0
        %v746 = vmax.f32 %v684, 0.0
        %v747 = vmax.f32 %v687, 0.0
        %v748 = vmax.f32 %v692, 0.0
        %v749 = vmax.f32 %v695, 0.0
        %v750 = vmax.f32 %v700, 0.0
        %v751 = vmax.f32 %v703, 0.0
        %v752 = vmax.f32 %v708, 0.0
        %v753 = vmax.f32 %v711, 0.0
        %v754 = vmax.f32 %v716, 0.0
        %v755 = vmax.f32 %v719, 0.0
        %v756 = vmax.f32 %v724, 0.0
        %v757 = vmax.f32 %v727, 0.0
        %v758 = vmax.f32 %v732, 0.0
        %v759 = vmax.f32 %v735, 0.0
        %v760 = vmax.f32 %v740, 0.0
        %v761 = vmax.f32 %v743, 0.0
        %v762 = vpack.c.bf16 %v747, %v746
        %v763 = vpack.c.bf16 %v749, %v748
        %v764 = vpack.c.bf16 %v751, %v750
        %v765 = vpack.c.bf16 %v753, %v752
        %v766 = vpack.c.bf16 %v755, %v754
        %v767 = vpack.c.bf16 %v757, %v756
        %v768 = vpack.c.bf16 %v759, %v758
        %v769 = vpack.c.bf16 %v761, %v760
        %v770 = vld [vmem:[%s5] sm:$0xf]
        %v771 = vld [vmem:[%s5 + $0x4] sm:$0xf]
        %v772 = vld [vmem:[%s5 + $0x8] sm:$0xf]
        %v773 = vld [vmem:[%s5 + $0xc] sm:$0xf]
        %v774 = vld [vmem:[%s5 + $0x10] sm:$0xf]
        %v775 = vld [vmem:[%s5 + $0x14] sm:$0xf]
        %v776 = vld [vmem:[%s5 + $0x18] sm:$0xf]
        %v777 = vld [vmem:[%s5 + $0x1c] sm:$0xf]
        %v778 = vld [vmem:[%s6] sm:$0x1]
        %v780 = vlaneseq
        %v781 = vshrl.u32 %v780, 7
        %v782 = vsub.s32 0, %v781
        %v783 = vrot.slane %v778, %v782
        %v793 = vunpack.c.l.b16 %v770
        %v794 = vunpack.c.l.b16 %v771
        %v795 = vunpack.c.l.b16 %v772
        %v796 = vunpack.c.l.b16 %v773
        %v797 = vunpack.c.l.b16 %v774
        %v798 = vunpack.c.l.b16 %v775
        %v799 = vunpack.c.l.b16 %v776
        %v800 = vunpack.c.l.b16 %v777
        %v801 = vpack.c.b16 %v794, %v793
        %v802 = vpack.c.b16 %v796, %v795
        %v803 = vpack.c.b16 %v798, %v797
        %v804 = vpack.c.b16 %v800, %v799
        %vm809 = vcmask 523264
        %v811 = vsel %vm809, %v762, 0
        %v814 = vsel %vm809, %v763, 0
        %v817 = vsel %vm809, %v764, 0
        %v820 = vsel %vm809, %v765, 0
        %v823 = vsel %vm809, %v766, 0
        %v826 = vsel %vm809, %v767, 0
        %v829 = vsel %vm809, %v768, 0
        %v832 = vsel %vm809, %v769, 0
        %834 = vmatprep.subr.bf16.mxu0 0
        %835 = vmatpush1.bf16.msra.mxu0 0
        %836 = vmatprep.subr.bf16.mxu0 0
        %837 = vmatpush1.bf16.msra.mxu0 0
        %838 = vmatprep.subr.bf16.mxu0 0
        %839 = vmatpush1.bf16.msra.mxu0 0
        %840 = vmatprep.subr.bf16.mxu0 0
        %841 = vmatpush1.bf16.msra.mxu0 0
        %842 = vmatprep.subr.bf16.mxu0 0
        %843 = vmatpush1.bf16.msra.mxu0 %v804
        %844 = vmatprep.subr.bf16.mxu0 0
        %845 = vmatpush1.bf16.msra.mxu0 %v803
        %846 = vmatprep.subr.bf16.mxu0 0
        %847 = vmatpush1.bf16.msra.mxu0 %v802
        %848 = vmatprep.subr.bf16.mxu0 0
        %849 = vmatpush1.bf16.msra.mxu0 %v801
        %850 = vmatprep.subr.bf16.mxu0 0
        %851 = vmatpush2.bf16.msra.mxu0 0
        %852 = vmatprep.subr.bf16.mxu0 0
        %853 = vmatpush2.bf16.msra.mxu0 0
        %854 = vmatprep.subr.bf16.mxu0 0
        %855 = vmatpush2.bf16.msra.mxu0 0
        %856 = vmatprep.subr.bf16.mxu0 0
        %857 = vmatpush2.bf16.msra.mxu0 0
        %858 = vmatprep.subr.bf16.mxu0 0
        %859 = vmatpush2.bf16.msra.mxu0 0
        %860 = vmatprep.subr.bf16.mxu0 0
        %861 = vmatpush2.bf16.msra.mxu0 0
        %862 = vmatprep.subr.bf16.mxu0 0
        %863 = vmatpush2.bf16.msra.mxu0 0
        %864 = vmatprep.subr.bf16.mxu0 0
        %865 = vmatpush2.bf16.msra.mxu0 0
        %866 = vmatprep.mubr.bf16.mxu0 0
        %867 = vmatmul.mubr.bf16.gmra.mxu0 %v811
        %v868 = vpop.f32.mrf.mxu0
        %v869 = vadd.f32 %v783, %v868
        %v870 = vpop.f32.mrf.mxu0
        %v871 = vpop.f32.mrf.mxu0
        %v872 = vadd.f32 %v783, %v871
        %v873 = vpop.f32.mrf.mxu0
        %874 = vmatprep.mubr.bf16.mxu0 0
        %875 = vmatmul.mubr.bf16.gmra.mxu0 %v814
        %v876 = vpop.f32.mrf.mxu0
        %v877 = vadd.f32 %v783, %v876
        %v878 = vpop.f32.mrf.mxu0
        %v879 = vpop.f32.mrf.mxu0
        %v880 = vadd.f32 %v783, %v879
        %v881 = vpop.f32.mrf.mxu0
        %882 = vmatprep.mubr.bf16.mxu0 0
        %883 = vmatmul.mubr.bf16.gmra.mxu0 %v817
        %v884 = vpop.f32.mrf.mxu0
        %v885 = vadd.f32 %v783, %v884
        %v886 = vpop.f32.mrf.mxu0
        %v887 = vpop.f32.mrf.mxu0
        %v888 = vadd.f32 %v783, %v887
        %v889 = vpop.f32.mrf.mxu0
        %890 = vmatprep.mubr.bf16.mxu0 0
        %891 = vmatmul.mubr.bf16.gmra.mxu0 %v820
        %v892 = vpop.f32.mrf.mxu0
        %v893 = vadd.f32 %v783, %v892
        %v894 = vpop.f32.mrf.mxu0
        %v895 = vpop.f32.mrf.mxu0
        %v896 = vadd.f32 %v783, %v895
        %v897 = vpop.f32.mrf.mxu0
        %898 = vmatprep.mubr.bf16.mxu0 0
        %899 = vmatmul.mubr.bf16.gmra.mxu0 %v823
        %v900 = vpop.f32.mrf.mxu0
        %v901 = vadd.f32 %v783, %v900
        %v902 = vpop.f32.mrf.mxu0
        %v903 = vpop.f32.mrf.mxu0
        %v904 = vadd.f32 %v783, %v903
        %v905 = vpop.f32.mrf.mxu0
        %906 = vmatprep.mubr.bf16.mxu0 0
        %907 = vmatmul.mubr.bf16.gmra.mxu0 %v826
        %v908 = vpop.f32.mrf.mxu0
        %v909 = vadd.f32 %v783, %v908
        %v910 = vpop.f32.mrf.mxu0
        %v911 = vpop.f32.mrf.mxu0
        %v912 = vadd.f32 %v783, %v911
        %v913 = vpop.f32.mrf.mxu0
        %914 = vmatprep.mubr.bf16.mxu0 0
        %915 = vmatmul.mubr.bf16.gmra.mxu0 %v829
        %v916 = vpop.f32.mrf.mxu0
        %v917 = vadd.f32 %v783, %v916
        %v918 = vpop.f32.mrf.mxu0
        %v919 = vpop.f32.mrf.mxu0
        %v920 = vadd.f32 %v783, %v919
        %v921 = vpop.f32.mrf.mxu0
        %922 = vmatprep.mubr.bf16.mxu0 0
        %923 = vmatmul.mubr.bf16.gmra.mxu0 %v832
        %v924 = vpop.f32.mrf.mxu0
        %v925 = vadd.f32 %v783, %v924
        %v926 = vpop.f32.mrf.mxu0
        %v927 = vpop.f32.mrf.mxu0
        %v928 = vadd.f32 %v783, %v927
        %v929 = vpop.f32.mrf.mxu0
        %930 = vdwg.mxu0
        %v931 = vmax.f32 %v869, 0.0
        %v932 = vmax.f32 %v872, 0.0
        %v933 = vmax.f32 %v877, 0.0
        %v934 = vmax.f32 %v880, 0.0
        %v935 = vmax.f32 %v885, 0.0
        %v936 = vmax.f32 %v888, 0.0
        %v937 = vmax.f32 %v893, 0.0
        %v938 = vmax.f32 %v896, 0.0
        %v939 = vmax.f32 %v901, 0.0
        %v940 = vmax.f32 %v904, 0.0
        %v941 = vmax.f32 %v909, 0.0
        %v942 = vmax.f32 %v912, 0.0
        %v943 = vmax.f32 %v917, 0.0
        %v944 = vmax.f32 %v920, 0.0
        %v945 = vmax.f32 %v925, 0.0
        %v946 = vmax.f32 %v928, 0.0
        %v947 = vpack.c.bf16 %v932, %v931
        %v948 = vpack.c.bf16 %v934, %v933
        %v949 = vpack.c.bf16 %v936, %v935
        %v950 = vpack.c.bf16 %v938, %v937
        %v951 = vpack.c.bf16 %v940, %v939
        %v952 = vpack.c.bf16 %v942, %v941
        %v953 = vpack.c.bf16 %v944, %v943
        %v954 = vpack.c.bf16 %v946, %v945
        %v955 = vld [vmem:[%s7] sm:$0xf]
        %v956 = vld [vmem:[%s7 + $0x4] sm:$0xf]
        %v957 = vld [vmem:[%s7 + $0x8] sm:$0xf]
        %v958 = vld [vmem:[%s7 + $0xc] sm:$0xf]
        %v959 = vld [vmem:[%s7 + $0x10] sm:$0xf]
        %v960 = vld [vmem:[%s7 + $0x14] sm:$0xf]
        %v961 = vld [vmem:[%s7 + $0x18] sm:$0xf]
        %v962 = vld [vmem:[%s7 + $0x1c] sm:$0xf]
        %v963 = vld [vmem:[%s7 + $0x20] sm:$0xf]
        %v964 = vld [vmem:[%s7 + $0x24] sm:$0xf]
        %v965 = vld [vmem:[%s7 + $0x28] sm:$0xf]
        %v966 = vld [vmem:[%s7 + $0x2c] sm:$0xf]
        %v967 = vld [vmem:[%s7 + $0x30] sm:$0xf]
        %v968 = vld [vmem:[%s7 + $0x34] sm:$0xf]
        %v969 = vld [vmem:[%s7 + $0x38] sm:$0xf]
        %v970 = vld [vmem:[%s7 + $0x3c] sm:$0xf]
        %v971 = vld [vmem:[%s8] sm:$0x1]
        %v973 = vlaneseq
        %v974 = vshrl.u32 %v973, 7
        %v975 = vsub.s32 0, %v974
        %v976 = vrot.slane %v971, %v975
        %v994 = vunpack.c.l.b16 %v955
        %v995 = vunpack.c.l.b16 %v956
        %v996 = vunpack.c.l.b16 %v957
        %v997 = vunpack.c.l.b16 %v958
        %v998 = vunpack.c.l.b16 %v959
        %v999 = vunpack.c.l.b16 %v960
        %v1000 = vunpack.c.l.b16 %v961
        %v1001 = vunpack.c.l.b16 %v962
        %v1002 = vunpack.c.l.b16 %v963
        %v1003 = vunpack.c.l.b16 %v964
        %v1004 = vunpack.c.l.b16 %v965
        %v1005 = vunpack.c.l.b16 %v966
        %v1006 = vunpack.c.l.b16 %v967
        %v1007 = vunpack.c.l.b16 %v968
        %v1008 = vunpack.c.l.b16 %v969
        %v1009 = vunpack.c.l.b16 %v970
        %v1010 = vpack.c.b16 %v995, %v994
        %v1011 = vpack.c.b16 %v997, %v996
        %v1012 = vpack.c.b16 %v999, %v998
        %v1013 = vpack.c.b16 %v1001, %v1000
        %v1014 = vpack.c.b16 %v1003, %v1002
        %v1015 = vpack.c.b16 %v1005, %v1004
        %v1016 = vpack.c.b16 %v1007, %v1006
        %v1017 = vpack.c.b16 %v1009, %v1008
        %1026 = vmatprep.subr.bf16.mxu0 0
        %1027 = vmatpush1.bf16.msra.mxu0 %v1017
        %1028 = vmatprep.subr.bf16.mxu0 0
        %1029 = vmatpush1.bf16.msra.mxu0 %v1016
        %1030 = vmatprep.subr.bf16.mxu0 0
        %1031 = vmatpush1.bf16.msra.mxu0 %v1015
        %1032 = vmatprep.subr.bf16.mxu0 0
        %1033 = vmatpush1.bf16.msra.mxu0 %v1014
        %1034 = vmatprep.subr.bf16.mxu0 0
        %1035 = vmatpush1.bf16.msra.mxu0 %v1013
        %1036 = vmatprep.subr.bf16.mxu0 0
        %1037 = vmatpush1.bf16.msra.mxu0 %v1012
        %1038 = vmatprep.subr.bf16.mxu0 0
        %1039 = vmatpush1.bf16.msra.mxu0 %v1011
        %1040 = vmatprep.subr.bf16.mxu0 0
        %1041 = vmatpush1.bf16.msra.mxu0 %v1010
        %1042 = vmatprep.subr.bf16.mxu0 0
        %1043 = vmatpush2.bf16.msra.mxu0 0
        %1044 = vmatprep.subr.bf16.mxu0 0
        %1045 = vmatpush2.bf16.msra.mxu0 0
        %1046 = vmatprep.subr.bf16.mxu0 0
        %1047 = vmatpush2.bf16.msra.mxu0 0
        %1048 = vmatprep.subr.bf16.mxu0 0
        %1049 = vmatpush2.bf16.msra.mxu0 0
        %1050 = vmatprep.subr.bf16.mxu0 0
        %1051 = vmatpush2.bf16.msra.mxu0 0
        %1052 = vmatprep.subr.bf16.mxu0 0
        %1053 = vmatpush2.bf16.msra.mxu0 0
        %1054 = vmatprep.subr.bf16.mxu0 0
        %1055 = vmatpush2.bf16.msra.mxu0 0
        %1056 = vmatprep.subr.bf16.mxu0 0
        %1057 = vmatpush2.bf16.msra.mxu0 0
        %1058 = vmatprep.mubr.bf16.mxu0 0
        %1059 = vmatmul.mubr.bf16.gmra.mxu0 %v947
        %v1060 = vpop.f32.mrf.mxu0
        %v1061 = vadd.f32 %v976, %v1060
        %v1062 = vpop.f32.mrf.mxu0
        %v1063 = vpop.f32.mrf.mxu0
        %v1064 = vadd.f32 %v976, %v1063
        %v1065 = vpop.f32.mrf.mxu0
        %1066 = vmatprep.mubr.bf16.mxu0 0
        %1067 = vmatmul.mubr.bf16.gmra.mxu0 %v948
        %v1068 = vpop.f32.mrf.mxu0
        %v1069 = vadd.f32 %v976, %v1068
        %v1070 = vpop.f32.mrf.mxu0
        %v1071 = vpop.f32.mrf.mxu0
        %v1072 = vadd.f32 %v976, %v1071
        %v1073 = vpop.f32.mrf.mxu0
        %1074 = vmatprep.mubr.bf16.mxu0 0
        %1075 = vmatmul.mubr.bf16.gmra.mxu0 %v949
        %v1076 = vpop.f32.mrf.mxu0
        %v1077 = vadd.f32 %v976, %v1076
        %v1078 = vpop.f32.mrf.mxu0
        %v1079 = vpop.f32.mrf.mxu0
        %v1080 = vadd.f32 %v976, %v1079
        %v1081 = vpop.f32.mrf.mxu0
        %1082 = vmatprep.mubr.bf16.mxu0 0
        %1083 = vmatmul.mubr.bf16.gmra.mxu0 %v950
        %v1084 = vpop.f32.mrf.mxu0
        %v1085 = vadd.f32 %v976, %v1084
        %v1086 = vpop.f32.mrf.mxu0
        %v1087 = vpop.f32.mrf.mxu0
        %v1088 = vadd.f32 %v976, %v1087
        %v1089 = vpop.f32.mrf.mxu0
        %1090 = vmatprep.mubr.bf16.mxu0 0
        %1091 = vmatmul.mubr.bf16.gmra.mxu0 %v951
        %v1092 = vpop.f32.mrf.mxu0
        %v1093 = vadd.f32 %v976, %v1092
        %v1094 = vpop.f32.mrf.mxu0
        %v1095 = vpop.f32.mrf.mxu0
        %v1096 = vadd.f32 %v976, %v1095
        %v1097 = vpop.f32.mrf.mxu0
        %1098 = vmatprep.mubr.bf16.mxu0 0
        %1099 = vmatmul.mubr.bf16.gmra.mxu0 %v952
        %v1100 = vpop.f32.mrf.mxu0
        %v1101 = vadd.f32 %v976, %v1100
        %v1102 = vpop.f32.mrf.mxu0
        %v1103 = vpop.f32.mrf.mxu0
        %v1104 = vadd.f32 %v976, %v1103
        %v1105 = vpop.f32.mrf.mxu0
        %1106 = vmatprep.mubr.bf16.mxu0 0
        %1107 = vmatmul.mubr.bf16.gmra.mxu0 %v953
        %v1108 = vpop.f32.mrf.mxu0
        %v1109 = vadd.f32 %v976, %v1108
        %v1110 = vpop.f32.mrf.mxu0
        %v1111 = vpop.f32.mrf.mxu0
        %v1112 = vadd.f32 %v976, %v1111
        %v1113 = vpop.f32.mrf.mxu0
        %1114 = vmatprep.mubr.bf16.mxu0 0
        %1115 = vmatmul.mubr.bf16.gmra.mxu0 %v954
        %v1116 = vpop.f32.mrf.mxu0
        %v1117 = vadd.f32 %v976, %v1116
        %v1118 = vpop.f32.mrf.mxu0
        %v1119 = vpop.f32.mrf.mxu0
        %v1120 = vadd.f32 %v976, %v1119
        %v1121 = vpop.f32.mrf.mxu0
        %1122 = vdwg.mxu0
        %v1123 = vmax.f32 %v1061, 0.0
        %v1124 = vmax.f32 %v1064, 0.0
        %v1125 = vmax.f32 %v1069, 0.0
        %v1126 = vmax.f32 %v1072, 0.0
        %v1127 = vmax.f32 %v1077, 0.0
        %v1128 = vmax.f32 %v1080, 0.0
        %v1129 = vmax.f32 %v1085, 0.0
        %v1130 = vmax.f32 %v1088, 0.0
        %v1131 = vmax.f32 %v1093, 0.0
        %v1132 = vmax.f32 %v1096, 0.0
        %v1133 = vmax.f32 %v1101, 0.0
        %v1134 = vmax.f32 %v1104, 0.0
        %v1135 = vmax.f32 %v1109, 0.0
        %v1136 = vmax.f32 %v1112, 0.0
        %v1137 = vmax.f32 %v1117, 0.0
        %v1138 = vmax.f32 %v1120, 0.0
        %v1139 = vld [vmem:[%s9] sm:$0xff]
        %v1141 = vsel %vm809, %v1139, 0
        %v1144 = vsel %vm809, %v1123, 0
        %v1147 = vsel %vm809, %v1124, 0
        %v1150 = vsel %vm809, %v1125, 0
        %v1153 = vsel %vm809, %v1126, 0
        %v1156 = vsel %vm809, %v1127, 0
        %v1159 = vsel %vm809, %v1128, 0
        %v1162 = vsel %vm809, %v1129, 0
        %v1165 = vsel %vm809, %v1130, 0
        %v1168 = vsel %vm809, %v1131, 0
        %v1171 = vsel %vm809, %v1132, 0
        %v1174 = vsel %vm809, %v1133, 0
        %v1177 = vsel %vm809, %v1134, 0
        %v1180 = vsel %vm809, %v1135, 0
        %v1183 = vsel %vm809, %v1136, 0
        %v1186 = vsel %vm809, %v1137, 0
        %v1189 = vsel %vm809, %v1138, 0
        %1191 = vmatprep.subr.mxu0 0.0
        %1192 = vmatpush1.xpose.msra.mxu0 %v1189
        %1193 = vmatprep.subr.mxu0 0.0
        %1194 = vmatpush1.xpose.msra.mxu0 %v1186
        %1195 = vmatprep.subr.mxu0 0.0
        %1196 = vmatpush1.xpose.msra.mxu0 %v1183
        %1197 = vmatprep.subr.mxu0 0.0
        %1198 = vmatpush1.xpose.msra.mxu0 %v1180
        %1199 = vmatprep.subr.mxu0 0.0
        %1200 = vmatpush1.xpose.msra.mxu0 %v1177
        %1201 = vmatprep.subr.mxu0 0.0
        %1202 = vmatpush1.xpose.msra.mxu0 %v1174
        %1203 = vmatprep.subr.mxu0 0.0
        %1204 = vmatpush1.xpose.msra.mxu0 %v1171
        %1205 = vmatprep.subr.mxu0 0.0
        %1206 = vmatpush1.xpose.msra.mxu0 %v1168
        %1207 = vmatprep.subr.mxu0 0.0
        %1208 = vmatpush1.xpose.msra.mxu0 %v1165
        %1209 = vmatprep.subr.mxu0 0.0
        %1210 = vmatpush1.xpose.msra.mxu0 %v1162
        %1211 = vmatprep.subr.mxu0 0.0
        %1212 = vmatpush1.xpose.msra.mxu0 %v1159
        %1213 = vmatprep.subr.mxu0 0.0
        %1214 = vmatpush1.xpose.msra.mxu0 %v1156
        %1215 = vmatprep.subr.mxu0 0.0
        %1216 = vmatpush1.xpose.msra.mxu0 %v1153
        %1217 = vmatprep.subr.mxu0 0.0
        %1218 = vmatpush1.xpose.msra.mxu0 %v1150
        %1219 = vmatprep.subr.mxu0 0.0
        %1220 = vmatpush1.xpose.msra.mxu0 %v1147
        %1221 = vmatprep.subr.mxu0 0.0
        %1222 = vmatpush1.xpose.msra.mxu0 %v1144
        %1223 = vmatprep.subr.mxu0 0.0
        %1224 = vmatpush2.xpose.msra.mxu0 0.0
        %1225 = vmatprep.subr.mxu0 0.0
        %1226 = vmatpush2.xpose.msra.mxu0 0.0
        %1227 = vmatprep.subr.mxu0 0.0
        %1228 = vmatpush2.xpose.msra.mxu0 0.0
        %1229 = vmatprep.subr.mxu0 0.0
        %1230 = vmatpush2.xpose.msra.mxu0 0.0
        %1231 = vmatprep.subr.mxu0 0.0
        %1232 = vmatpush2.xpose.msra.mxu0 0.0
        %1233 = vmatprep.subr.mxu0 0.0
        %1234 = vmatpush2.xpose.msra.mxu0 0.0
        %1235 = vmatprep.subr.mxu0 0.0
        %1236 = vmatpush2.xpose.msra.mxu0 0.0
        %1237 = vmatprep.subr.mxu0 0.0
        %1238 = vmatpush2.xpose.msra.mxu0 0.0
        %1239 = vmatprep.subr.mxu0 0.0
        %1240 = vmatpush2.xpose.msra.mxu0 0.0
        %1241 = vmatprep.subr.mxu0 0.0
        %1242 = vmatpush2.xpose.msra.mxu0 0.0
        %1243 = vmatprep.subr.mxu0 0.0
        %1244 = vmatpush2.xpose.msra.mxu0 0.0
        %1245 = vmatprep.subr.mxu0 0.0
        %1246 = vmatpush2.xpose.msra.mxu0 0.0
        %1247 = vmatprep.subr.mxu0 0.0
        %1248 = vmatpush2.xpose.msra.mxu0 0.0
        %1249 = vmatprep.subr.mxu0 0.0
        %1250 = vmatpush2.xpose.msra.mxu0 0.0
        %1251 = vmatprep.subr.mxu0 0.0
        %1252 = vmatpush2.xpose.msra.mxu0 0.0
        %1253 = vmatprep.subr.mxu0 0.0
        %1254 = vmatpush2.xpose.msra.mxu0 0.0
        %1255 = vmatprep.mubr.f32.mxu0 0.0
        %1256 = vmatmul.mubr.f32.gmra.mxu0 %v1141
        %v1257 = vpop.f32.mrf.mxu0
        %v1258 = vadd.f32 0.0, %v1257
        %v1259 = vpop.f32.mrf.mxu0
        %1260 = vdwg.mxu0
        %v1261 = vld [vmem:[#allocation2] sm:$0x1]
        %1263 = vset.pattern.permute.xlu0 0
        %1264 = vperm.xlu0 %1263, %v1261
        %v1265 = vpop.permute.xlu0 %1264
        %v1267 = vlaneseq
        %v1268 = vshrl.u32 %v1267, 7
        %v1269 = vsub.s32 0, %v1268
        %v1270 = vrot.slane %v1265, %v1269
        %v1271 = vadd.f32 %v1258, %v1270
        %v1272 = vsub.f32 0.0, %v1271
        %v1273 = vmul.f32 %v1272, 1.442695
        %v1274 = vpow.pop %v1273
        %v1275 = vadd.f32 %v1274, 1.0
        %v1276 = vrcp.pop %v1275
        %1277 = vst [vmem:[%s393] sm:$0x1] %v1276
        %s1278 = sand.u32 %s271, 1
        %s1279 = scalar_lea.sflag [#allocation4], %s1278
        %s1280 = sand.u32 %s271, 1
        %s1281 = scalar_lea.vmem [#allocation3], %s1280
        // Predicated region
        $region65: #{tpu_custom_call.1} parent=63 // pred_check
          %p1282 = pneg %p281
        $region66: #{tpu_custom_call.1} parent=63 // pred_check_branch
          %1284 = sbr.rel (%p1282) target = $region68
        $region67: #{tpu_custom_call.1} parent=63 // pred_region
          %s1286 = ssub.s32 16, 16
          %1287 = vsyncadd %s1279, %s1286
          %s1288 = smul.addr %s27, 16
          %s1289 = scalar_lea.hbm %s11, %s1288
          %s1291 = sshll.u32 %s1281, 4
          %s1292 = int_to_ptr.vmem [resolvable:$true] %s1291
          %1294 = dma.vmem_to_hbm [thread:$0]  %s1292, 16, %s1289, %s1279
        $region68: #{tpu_custom_call.1} parent=63 // pred_fallthru
          _
      $region64: #{tpu_custom_call.1} parent=5 // pred_fallthru
        _
      %p1295 = scmp.le.s32.totalorder 2, %s22
      // Predicated region
      $region69: #{tpu_custom_call.1} parent=5 // pred_check
        %p1296 = pneg %p1295
      $region70: #{tpu_custom_call.1} parent=5 // pred_check_branch
        %1298 = sbr.rel (%p1296) target = $region72
      $region71: #{tpu_custom_call.1} parent=5 // pred_region
        %s1299 = ssub.s32 %s22, 2
        // Predicated region
        $region73: #{tpu_custom_call.1} parent=71 // pred_check
          %p1300 = pneg %p287
        $region74: #{tpu_custom_call.1} parent=71 // pred_check_branch
          %1302 = sbr.rel (%p1300) target = $region76
        $region75: #{tpu_custom_call.1} parent=71 // pred_region
          %s1303 = sand.u32 %s272, 1
          %s1304 = scalar_lea.sflag [#allocation4], %s1303
          %s1305 = sand.u32 %s272, 1
          %s1306 = scalar_lea.vmem [#allocation3], %s1305
          %1307 = dma.done %s1304, 16
        $region76: #{tpu_custom_call.1} parent=71 // pred_fallthru
          _
      $region72: #{tpu_custom_call.1} parent=5 // pred_fallthru
        _
    $region6: #{tpu_custom_call.1} parent=1 // loop_footer
      %s26 = sadd.s32 1, %s22
    $region7: #{tpu_custom_call.1} parent=1 // loop_footer_branch
      %21 = sbr.rel target = $region3
    $region8: #{tpu_custom_call.1} parent=1 // loop_exit
      _
    %1308 = vsyncpa [#allocation4], 1
    %s1309 = scalar_lea.sflag [#allocation4], 1
    %1310 = vsyncpa %s1309, 1

</llo_original>
